<compile_context>
chip_gen: v7x
topology: tpu7x:2x2x1
jax: 0.10.0
libtpu: 0.0.40
codegen_flags: <defaults>
</compile_context>

<pallas_src>
import jax
import jax.numpy as jnp
from jax.experimental import pallas as pl
from jax.experimental.pallas import tpu as pltpu


def _fma_kernel(foo_ref, x_ref, bar_ref, o_ref):
    # Elementwise hot path: a few VPU multiply-adds over the whole VMEM tile.
    o_ref[...] = foo_ref[...] * x_ref[...] + bar_ref[...]


def _sublane_multiple(itemsize: int) -> int:
    # 32-bit -> 8 rows/vreg, bf16 -> 16, int8/fp8 -> 32 (sub-32-bit packs along sublanes).
    return max(8, 32 // max(1, itemsize))


def _choose_layout(total: int, sublane: int):
    """Pick a lane-dense slab (rows, cols) with cols % 128 == 0 and rows % sublane == 0.

    Prefers wider cols for large inputs (bigger, unmasked DMAs / stores).
    Returns (rows, cols, pad_elements).
    """
    for cols in (4096, 2048, 1024, 512, 256, 128):
        if total % cols == 0 and (total // cols) % sublane == 0:
            return total // cols, cols, 0  # exact fit, no padding needed
    # Ragged fallback: narrowest lane-dense slab, pad rows up.
    cols = 128
    rows = -(-total // cols)
    rows = -(-rows // sublane) * sublane
    return rows, cols, rows * cols - total


def _choose_tile_rows(rows: int, cols: int, itemsize: int, sublane: int,
                      target_bytes: int = 2 << 20) -> int:
    """Largest tile (multiple of `sublane` rows, dividing `rows`) under ~target_bytes/operand."""
    max_rows = max(sublane, (target_bytes // (cols * itemsize)) // sublane * sublane)
    tr = min(rows, max_rows)
    while rows % tr != 0:
        tr -= sublane
    return tr


def module_with_slots_forward(x: jax.Array, foo: jax.Array, bar: jax.Array) -> jax.Array:
    """Pallas equivalent of `ModuleWithSlots.forward`: foo * x + bar."""
    assert x.shape == foo.shape == bar.shape, "this impl assumes same-shape operands"
    assert x.dtype == foo.dtype == bar.dtype, "this impl assumes same-dtype operands"
    orig_shape = x.shape
    dtype = x.dtype
    itemsize = jnp.dtype(dtype).itemsize
    total = x.size

    sublane = _sublane_multiple(itemsize)
    rows, cols, pad = _choose_layout(total, sublane)

    def to_slab(a):
        a = a.reshape(-1)
        if pad:
            # TODO(synk): for ragged tails on very large inputs, mask the final grid
            # step in-kernel instead of materializing padded input copies.
            a = jnp.pad(a, (0, pad))
        return a.reshape(rows, cols)

    x2, foo2, bar2 = to_slab(x), to_slab(foo), to_slab(bar)

    tile_rows = _choose_tile_rows(rows, cols, itemsize, sublane)
    grid = (rows // tile_rows,)
    spec = pl.BlockSpec((tile_rows, cols), lambda i: (i, 0))

    out2 = pl.pallas_call(
        _fma_kernel,
        out_shape=jax.ShapeDtypeStruct((rows, cols), dtype),
        grid=grid,
        in_specs=[spec, spec, spec],
        out_specs=spec,
        compiler_params=pltpu.CompilerParams(
            dimension_semantics=("parallel",),
            vmem_limit_bytes=32 << 20,
        ),
    )(foo2, x2, bar2)

    if pad:
        return out2.reshape(-1)[:total].reshape(orig_shape)
    return out2.reshape(orig_shape)


if __name__ == "__main__":
    key = jax.random.PRNGKey(0)
    kx, kfoo, kbar = jax.random.split(key, 3)

    shape = (2, 4, 16, 16)  # [B, C, H, W]
    x = jax.random.normal(kx, shape, dtype=jnp.float32)
    # Deterministic "parameters" (the module stores whatever tensors it is given).
    foo = jax.random.normal(kfoo, shape, dtype=jnp.float32)
    bar = jax.random.normal(kbar, shape, dtype=jnp.float32)

    out = module_with_slots_forward(x, foo, bar)
    out = jax.block_until_ready(out)

    ref = foo * x + bar
    assert out.shape == ref.shape and out.dtype == ref.dtype
    assert jnp.allclose(out, ref, atol=1e-6, rtol=1e-6)

    print("KERNEL_OK")
</pallas_src>

<mosaic_0001>
module attributes {stable_mosaic.version = 11 : i64} {
  func.func @_fma_kernel(%arg0: i32, %arg1: memref<8x256xf32, #tpu.memory_space<vmem>>, %arg2: memref<8x256xf32, #tpu.memory_space<vmem>>, %arg3: memref<8x256xf32, #tpu.memory_space<vmem>>, %arg4: memref<8x256xf32, #tpu.memory_space<vmem>>) attributes {dimension_semantics = [#tpu.dimension_semantics<parallel>], iteration_bounds = array<i64: 1>, scalar_prefetch = 0 : i64, scratch_operands = 0 : i64, tpu.core_type = #tpu.core_type<tc>, window_params = [{transform_indices = @transform_0, window_bounds = array<i64: 8, 256>}, {transform_indices = @transform_1, window_bounds = array<i64: 8, 256>}, {transform_indices = @transform_2, window_bounds = array<i64: 8, 256>}, {transform_indices = @transform_3, window_bounds = array<i64: 8, 256>}]} {
    %c0 = arith.constant 0 : index
    %c0_0 = arith.constant 0 : index
    %0 = vector.load %arg1[%c0, %c0_0] : memref<8x256xf32, #tpu.memory_space<vmem>>, vector<8x256xf32>
    %c0_1 = arith.constant 0 : index
    %c0_2 = arith.constant 0 : index
    %1 = vector.load %arg2[%c0_1, %c0_2] : memref<8x256xf32, #tpu.memory_space<vmem>>, vector<8x256xf32>
    %2 = arith.mulf %0, %1 : vector<8x256xf32>
    %c0_3 = arith.constant 0 : index
    %c0_4 = arith.constant 0 : index
    %3 = vector.load %arg3[%c0_3, %c0_4] : memref<8x256xf32, #tpu.memory_space<vmem>>, vector<8x256xf32>
    %4 = arith.addf %2, %3 : vector<8x256xf32>
    %c0_5 = arith.constant 0 : index
    %c0_6 = arith.constant 0 : index
    %5 = vector.load %arg4[%c0_5, %c0_6] : memref<8x256xf32, #tpu.memory_space<vmem>>, vector<8x256xf32>
    tpu.vector_store %arg4[%c0_5, %c0_6], %4 {strides = array<i32>} : memref<8x256xf32, #tpu.memory_space<vmem>>, vector<8x256xf32>,
    return
  }
  func.func @transform_0(%arg0: i32) -> (i32, i32) {
    %c0_i32 = arith.constant 0 : i32
    %c0_i32_0 = arith.constant 0 : i32
    return %arg0, %c0_i32 : i32, i32
  }
  func.func @transform_1(%arg0: i32) -> (i32, i32) {
    %c0_i32 = arith.constant 0 : i32
    %c0_i32_0 = arith.constant 0 : i32
    return %arg0, %c0_i32 : i32, i32
  }
  func.func @transform_2(%arg0: i32) -> (i32, i32) {
    %c0_i32 = arith.constant 0 : i32
    %c0_i32_0 = arith.constant 0 : i32
    return %arg0, %c0_i32 : i32, i32
  }
  func.func @transform_3(%arg0: i32) -> (i32, i32) {
    %c0_i32 = arith.constant 0 : i32
    %c0_i32_0 = arith.constant 0 : i32
    return %arg0, %c0_i32 : i32, i32
  }
}

</mosaic_0001>

<llo_original>
// kernel: tpu_custom_call.1
$region0: #{tpu_custom_call.1}
  #allocation0 [shape = 'u32[]', space=smem, size = 0x4, offset = 0x4, fixed_abs, tag = 'smem constant byte address 0x4 - core index']
  #allocation1 [shape = 'u32[144,128]{1,0:T(1,128)}', space=vmem, size = 0x12000, scoped, tag = 'internal scratch']
  %s0 = inlined_call_operand.hbm [shape: f32[8,256], index: 0, kind: input, shape index: {}]
  %s1 = inlined_call_operand.hbm [shape: f32[8,256], index: 1, kind: input, shape index: {}]
  %s2 = inlined_call_operand.hbm [shape: f32[8,256], index: 2, kind: input, shape index: {}]
  %s3 = inlined_call_operand.hbm [shape: f32[8,256], index: 3, kind: output, shape index: {}]
  %s4 = sld [smem:[#allocation0]]
  $region34: #{tpu_custom_call.1} parent=0
    _
  %s6 = ssub.s32 1, %s4
  %s7 = scalar_select 0, %s6, %s4
  $region1: #{tpu_custom_call.1} parent=0
    #allocation2 [shape = 'u8[8192]{0}', space=vmem, size = 0x2000, scoped, tag = 'input window, operand 0, single buffered']
    #allocation3 [shape = 's32[1]{0}', space=sflag, size = 0x4, scoped, tag = 'scoped memory for tpu_custom_call.1']
    #allocation4 [shape = 's32[1]{0}', space=sflag, size = 0x4, scoped, tag = 'scoped memory for tpu_custom_call.1']
    #allocation5 [shape = 'u8[8192]{0}', space=vmem, size = 0x2000, scoped, tag = 'input window, operand 1, single buffered']
    #allocation6 [shape = 's32[1]{0}', space=sflag, size = 0x4, scoped, tag = 'scoped memory for tpu_custom_call.1']
    #allocation7 [shape = 'u8[8192]{0}', space=vmem, size = 0x2000, scoped, tag = 'input window, operand 2, single buffered']
    #allocation8 [shape = 'u8[8192]{0}', space=vmem, size = 0x2000, scoped, tag = 'output window, operand 0, single buffered']
    %8 = vsyncpa [#allocation3], 0
    %9 = vsyncpa [#allocation6], 0
    %10 = vsyncpa [#allocation4], 0
    // Predicated region
    $region2: #{tpu_custom_call.1} parent=1 // pred_check
      _
    $region3: #{tpu_custom_call.1} parent=1 // pred_check_branch
      %12 = sbr.rel (0) target = $region5
    $region4: #{tpu_custom_call.1} parent=1 // pred_region
      %s14 = ssub.s32 256, 256
      %15 = vsyncadd [#allocation3], %s14
      %s17 = sshll.u32 [#allocation2], 4
      %s18 = int_to_ptr.vmem [resolvable:$true] %s17
      %20 = dma.hbm_to_vmem [thread:$0]  %s0, 256, %s18, [#allocation3]
    $region5: #{tpu_custom_call.1} parent=1 // pred_fallthru
      _
    // Predicated region
    $region6: #{tpu_custom_call.1} parent=1 // pred_check
      _
    $region7: #{tpu_custom_call.1} parent=1 // pred_check_branch
      %22 = sbr.rel (0) target = $region9
    $region8: #{tpu_custom_call.1} parent=1 // pred_region
      %s24 = ssub.s32 256, 256
      %25 = vsyncadd [#allocation6], %s24
      %s27 = sshll.u32 [#allocation5], 4
      %s28 = int_to_ptr.vmem [resolvable:$true] %s27
      %30 = dma.hbm_to_vmem [thread:$0]  %s1, 256, %s28, [#allocation6]
    $region9: #{tpu_custom_call.1} parent=1 // pred_fallthru
      _
    // Predicated region
    $region10: #{tpu_custom_call.1} parent=1 // pred_check
      _
    $region11: #{tpu_custom_call.1} parent=1 // pred_check_branch
      %32 = sbr.rel (0) target = $region13
    $region12: #{tpu_custom_call.1} parent=1 // pred_region
      %s34 = ssub.s32 256, 256
      %35 = vsyncadd [#allocation6], %s34
      %s37 = sshll.u32 [#allocation7], 4
      %s38 = int_to_ptr.vmem [resolvable:$true] %s37
      %40 = dma.hbm_to_vmem [thread:$0]  %s2, 256, %s38, [#allocation6]
    $region13: #{tpu_custom_call.1} parent=1 // pred_fallthru
      _
    // Predicated region
    $region14: #{tpu_custom_call.1} parent=1 // pred_check
      _
    $region15: #{tpu_custom_call.1} parent=1 // pred_check_branch
      %42 = sbr.rel (0) target = $region17
    $region16: #{tpu_custom_call.1} parent=1 // pred_region
      %43 = dma.done [#allocation3], 256
    $region17: #{tpu_custom_call.1} parent=1 // pred_fallthru
      _
    // Predicated region
    $region18: #{tpu_custom_call.1} parent=1 // pred_check
      _
    $region19: #{tpu_custom_call.1} parent=1 // pred_check_branch
      %45 = sbr.rel (0) target = $region21
    $region20: #{tpu_custom_call.1} parent=1 // pred_region
      %46 = dma.done [#allocation6], 256
    $region21: #{tpu_custom_call.1} parent=1 // pred_fallthru
      _
    // Predicated region
    $region22: #{tpu_custom_call.1} parent=1 // pred_check
      _
    $region23: #{tpu_custom_call.1} parent=1 // pred_check_branch
      %48 = sbr.rel (0) target = $region25
    $region24: #{tpu_custom_call.1} parent=1 // pred_region
      %49 = dma.done [#allocation6], 256
    $region25: #{tpu_custom_call.1} parent=1 // pred_fallthru
      _
    %v50 = vld [vmem:[#allocation2] sm:$0xff]
    %v51 = vld [vmem:[#allocation2 + $0x8] sm:$0xff]
    %v52 = vld [vmem:[#allocation5] sm:$0xff]
    %v53 = vld [vmem:[#allocation5 + $0x8] sm:$0xff]
    %v54 = vmul.f32 %v50, %v52
    %v55 = vmul.f32 %v51, %v53
    %v56 = vld [vmem:[#allocation7] sm:$0xff]
    %v57 = vld [vmem:[#allocation7 + $0x8] sm:$0xff]
    %v58 = vadd.f32 %v54, %v56
    %v59 = vadd.f32 %v55, %v57
    %60 = vst [vmem:[#allocation8] sm:$0xff] %v58
    %61 = vst [vmem:[#allocation8 + $0x8] sm:$0xff] %v59
    // Predicated region
    $region26: #{tpu_custom_call.1} parent=1 // pred_check
      _
    $region27: #{tpu_custom_call.1} parent=1 // pred_check_branch
      %63 = sbr.rel (0) target = $region29
    $region28: #{tpu_custom_call.1} parent=1 // pred_region
      %s65 = ssub.s32 256, 256
      %66 = vsyncadd [#allocation4], %s65
      %s68 = sshll.u32 [#allocation8], 4
      %s69 = int_to_ptr.vmem [resolvable:$true] %s68
      %71 = dma.vmem_to_hbm [thread:$0]  %s69, 256, %s3, [#allocation4]
    $region29: #{tpu_custom_call.1} parent=1 // pred_fallthru
      _
    // Predicated region
    $region30: #{tpu_custom_call.1} parent=1 // pred_check
      _
    $region31: #{tpu_custom_call.1} parent=1 // pred_check_branch
      %73 = sbr.rel (0) target = $region33
    $region32: #{tpu_custom_call.1} parent=1 // pred_region
      %74 = dma.done [#allocation4], 256
    $region33: #{tpu_custom_call.1} parent=1 // pred_fallthru
      _
    %75 = vsyncpa [#allocation3], 1
    %76 = vsyncpa [#allocation6], 1
    %77 = vsyncpa [#allocation4], 1

</llo_original>
